<compile_context>
chip_gen: v7x
topology: tpu7x:2x2x1
jax: 0.10.0
libtpu: 0.0.40
codegen_flags: <defaults>
</compile_context>

<pallas_src>
import jax
import jax.numpy as jnp
from jax import lax
from jax.experimental import pallas as pl
from jax.experimental.pallas import tpu as pltpu


def _round_up(a, b):
    return (a + b - 1) // b * b


def _xyz_linear_kernel(x_ref, w_ref, b_ref, o_ref):
    # x_ref: (TR, Kp) input rows (original dtype); w_ref: (Kp, Ep) f32;
    # b_ref: (1, Ep) f32; o_ref: (TR, Ep) output dtype.
    x = x_ref[...].astype(jnp.float32)
    y = jnp.dot(x, w_ref[...],
                precision=lax.Precision.HIGHEST,
                preferred_element_type=jnp.float32)
    o_ref[...] = (y + b_ref[...]).astype(o_ref.dtype)


def decode_xyz_pos_embed(unseen_xyz, weight, bias):
    """y = unseen_xyz @ weight.T + bias, matching nn.Linear(3, embed_dim).

    unseen_xyz: (..., 3); weight: (embed_dim, 3) [PyTorch]; bias: (embed_dim,).
    Returns (..., embed_dim) in unseen_xyz.dtype.
    """
    orig_shape = unseen_xyz.shape
    in_dim = orig_shape[-1]
    embed_dim = weight.shape[0]
    out_dtype = unseen_xyz.dtype
    out_isz = jnp.dtype(out_dtype).itemsize
    x_isz = jnp.dtype(unseen_xyz.dtype).itemsize

    x2 = unseen_xyz.reshape(-1, in_dim)          # free, contiguous reshape
    rows = x2.shape[0]
    if rows == 0:
        return jnp.zeros(orig_shape[:-1] + (embed_dim,), out_dtype)

    # Parameters: f32, (K, E) / (1, E); tiny, prepared once in the wrapper and
    # DMA'd once (constant index_map).
    w = jnp.transpose(weight.astype(jnp.float32))          # (in_dim, E)
    b = bias.astype(jnp.float32).reshape(1, embed_dim)

    # Lane-dense output packing for small embed_dim: group G consecutive rows
    # so the output last dim becomes G*E >= 128 (unmasked full-lane stores,
    # dense output DMA).  x / out reshapes are free; weight becomes
    # block-diagonal via kron, bias is tiled.
    G = 1
    if embed_dim < 128 and 128 % embed_dim == 0:
        g = 128 // embed_dim
        if rows % g == 0:
            G = g
    if G > 1:
        x2 = x2.reshape(rows // G, G * in_dim)
        w = jnp.kron(jnp.eye(G, dtype=jnp.float32), w)      # (G*in_dim, G*E)
        b = jnp.tile(b, (1, G))                              # (1, G*E)

    rows_p, k_p = x2.shape
    e_p = w.shape[1]

    # ---- Tile-size selection ------------------------------------------------
    out_row_bytes = _round_up(e_p, 128) * out_isz            # lane-padded out
    in_row_bytes = _round_up(k_p, 128) * x_isz                # lane-padded in (K << 128)
    TARGET_OUT_BYTES = 8 * 1024 * 1024                        # ~8 MiB output / step
    MIN_GRID_STEPS = 8                                         # megacore balance
    VMEM_BUDGET = 28 * 1024 * 1024                             # double-buffered blocks

    tr_bytes = _round_up(max(TARGET_OUT_BYTES // out_row_bytes, 1), 8)
    tr_grid = _round_up(pl.cdiv(rows_p, MIN_GRID_STEPS), 8)
    tr = min(tr_bytes, max(tr_grid, 512))

    # Double-buffered in+out blocks plus (conservatively double-buffered)
    # params must fit the VMEM budget; input counted at its lane-padded size.
    param_bytes = 2 * (_round_up(k_p, 8) + 8) * _round_up(e_p, 128) * 4
    per_row_bytes = 2 * (in_row_bytes + out_row_bytes)
    max_tr = max(8, (max(VMEM_BUDGET - param_bytes, per_row_bytes * 8)
                     // per_row_bytes) // 8 * 8)
    tr = max(8, min(tr, max_tr))
    if tr >= rows_p:
        tr = rows_p          # single full block (block == array dims is legal)

    grid = (pl.cdiv(rows_p, tr),)   # ragged last block is masked by Pallas:
                                    # no row padding, no post-kernel slice.

    footprint = per_row_bytes * tr + param_bytes
    vmem_limit = int(min(max(footprint + (4 << 20), 16 << 20), 32 << 20))

    out = pl.pallas_call(
        _xyz_linear_kernel,
        out_shape=jax.ShapeDtypeStruct((rows_p, e_p), out_dtype),
        grid_spec=pltpu.PrefetchScalarGridSpec(
            num_scalar_prefetch=0,
            grid=grid,
            in_specs=[
                pl.BlockSpec((tr, k_p), lambda i: (i, 0)),
                pl.BlockSpec((k_p, e_p), lambda i: (0, 0)),
                pl.BlockSpec((1, e_p), lambda i: (0, 0)),
            ],
            out_specs=pl.BlockSpec((tr, e_p), lambda i: (i, 0)),
        ),
        compiler_params=pltpu.CompilerParams(
            dimension_semantics=("parallel",),
            vmem_limit_bytes=vmem_limit,
        ),
    )(x2, w, b)

    # Free reshape back to (..., embed_dim) (contiguous, matches packing order).
    return out.reshape(orig_shape[:-1] + (embed_dim,))


if __name__ == "__main__":
    key = jax.random.PRNGKey(0)
    fn = jax.jit(decode_xyz_pos_embed)

    def run_case(batch, n_points, embed_dim):
        k_x, k_w, k_b = jax.random.split(jax.random.fold_in(key, embed_dim), 3)
        unseen_xyz = jax.random.normal(k_x, (batch, n_points, 3), dtype=jnp.float32)
        # nn.Linear(3, embed_dim) params (PyTorch convention: weight (out, in)).
        weight = jax.random.normal(k_w, (embed_dim, 3), dtype=jnp.float32) * 0.1
        bias = jax.random.normal(k_b, (embed_dim,), dtype=jnp.float32) * 0.1

        out = fn(unseen_xyz, weight, bias)
        out = jax.block_until_ready(out)

        # Exact-f32 elementwise reference: y = x @ W.T + b.
        ref = (unseen_xyz[..., None, :] * weight[None, None, :, :]).sum(-1) + bias

        assert out.shape == (batch, n_points, embed_dim), out.shape
        err = float(jnp.max(jnp.abs(out - ref)))
        assert err < 1e-4, f"max abs err {err} (E={embed_dim})"

    run_case(batch=2, n_points=8, embed_dim=32)    # lane-packed path (E < 128)
    run_case(batch=2, n_points=8, embed_dim=256)   # plain path (E >= 128)
    print("KERNEL_OK")
</pallas_src>

<mosaic_0001>
module attributes {stable_mosaic.version = 11 : i64} {
  func.func @_xyz_linear_kernel(%arg0: i32, %arg1: memref<4x12xf32, #tpu.memory_space<vmem>>, %arg2: memref<12x128xf32, #tpu.memory_space<vmem>>, %arg3: memref<1x128xf32, #tpu.memory_space<vmem>>, %arg4: memref<4x128xf32, #tpu.memory_space<vmem>>) attributes {dimension_semantics = [#tpu.dimension_semantics<parallel>], iteration_bounds = array<i64: 1>, scalar_prefetch = 0 : i64, scratch_operands = 0 : i64, tpu.core_type = #tpu.core_type<tc>, window_params = [{transform_indices = @transform_0, window_bounds = array<i64: 4, 12>}, {pipeline_mode = #tpu.pipeline_mode<synchronous>, transform_indices = @transform_1, window_bounds = array<i64: 12, 128>}, {pipeline_mode = #tpu.pipeline_mode<synchronous>, transform_indices = @transform_2, window_bounds = array<i64: 1, 128>}, {transform_indices = @transform_3, window_bounds = array<i64: 4, 128>}]} {
    %c0 = arith.constant 0 : index
    %c0_0 = arith.constant 0 : index
    %0 = vector.load %arg1[%c0, %c0_0] : memref<4x12xf32, #tpu.memory_space<vmem>>, vector<4x12xf32>
    %c0_1 = arith.constant 0 : index
    %c0_2 = arith.constant 0 : index
    %1 = vector.load %arg2[%c0_1, %c0_2] : memref<12x128xf32, #tpu.memory_space<vmem>>, vector<12x128xf32>
    %cst = arith.constant dense<0.000000e+00> : vector<4x128xf32>
    %2 = tpu.matmul %0, %1, %cst {dimension_numbers = #tpu.dot_dimension_numbers<[1], [0], [0], [1], [0, 0, 1, 1], [], []>, precision = #tpu.contract_precision<fp32>} : vector<4x12xf32>, vector<12x128xf32>, vector<4x128xf32> -> vector<4x128xf32>
    %c0_3 = arith.constant 0 : index
    %c0_4 = arith.constant 0 : index
    %3 = vector.load %arg3[%c0_3, %c0_4] : memref<1x128xf32, #tpu.memory_space<vmem>>, vector<1x128xf32>
    %4 = vector.broadcast %3 : vector<1x128xf32> to vector<4x128xf32>
    %5 = arith.addf %2, %4 : vector<4x128xf32>
    %c0_5 = arith.constant 0 : index
    %c0_6 = arith.constant 0 : index
    %6 = vector.load %arg4[%c0_5, %c0_6] : memref<4x128xf32, #tpu.memory_space<vmem>>, vector<4x128xf32>
    tpu.vector_store %arg4[%c0_5, %c0_6], %5 {strides = array<i32>} : memref<4x128xf32, #tpu.memory_space<vmem>>, vector<4x128xf32>,
    return
  }
  func.func @transform_0(%arg0: i32) -> (i32, i32) {
    %c0_i32 = arith.constant 0 : i32
    %c0_i32_0 = arith.constant 0 : i32
    return %arg0, %c0_i32 : i32, i32
  }
  func.func @transform_1(%arg0: i32) -> (i32, i32) {
    %c0_i32 = arith.constant 0 : i32
    %c0_i32_0 = arith.constant 0 : i32
    %c0_i32_1 = arith.constant 0 : i32
    return %c0_i32, %c0_i32_0 : i32, i32
  }
  func.func @transform_2(%arg0: i32) -> (i32, i32) {
    %c0_i32 = arith.constant 0 : i32
    %c0_i32_0 = arith.constant 0 : i32
    %c0_i32_1 = arith.constant 0 : i32
    return %c0_i32, %c0_i32_0 : i32, i32
  }
  func.func @transform_3(%arg0: i32) -> (i32, i32) {
    %c0_i32 = arith.constant 0 : i32
    %c0_i32_0 = arith.constant 0 : i32
    return %arg0, %c0_i32 : i32, i32
  }
}

</mosaic_0001>

<llo_original>
// kernel: decode_xyz_pos_embed.1
$region0: #{decode_xyz_pos_embed.1}
  #allocation0 [shape = 'u32[]', space=smem, size = 0x4, offset = 0x4, fixed_abs, tag = 'smem constant byte address 0x4 - core index']
  #allocation1 [shape = 'u32[144,128]{1,0:T(1,128)}', space=vmem, size = 0x12000, scoped, tag = 'internal scratch']
  %s0 = inlined_call_operand.vmem [shape: f32[4,12], index: 0, kind: input, shape index: {}]
  %s1 = inlined_call_operand.vmem [shape: f32[12,128], index: 1, kind: input, shape index: {}]
  %s2 = inlined_call_operand.vmem [shape: f32[1,128], index: 2, kind: input, shape index: {}]
  %s3 = inlined_call_operand.vmem [shape: f32[4,128], index: 3, kind: output, shape index: {}]
  %s4 = sld [smem:[#allocation0]]
  $region22: #{decode_xyz_pos_embed.1} parent=0
    _
  %s6 = ssub.s32 1, %s4
  %s7 = scalar_select 0, %s6, %s4
  // Predicated region
  $region2: #{decode_xyz_pos_embed.1} parent=0 // pred_check
    _
  $region3: #{decode_xyz_pos_embed.1} parent=0 // pred_check_branch
    %9 = sbr.rel (0) target = $region5
  $region4: #{decode_xyz_pos_embed.1} parent=0 // pred_region
    _
  $region5: #{decode_xyz_pos_embed.1} parent=0 // pred_fallthru
    _
  // Predicated region
  $region6: #{decode_xyz_pos_embed.1} parent=0 // pred_check
    _
  $region7: #{decode_xyz_pos_embed.1} parent=0 // pred_check_branch
    %11 = sbr.rel (0) target = $region9
  $region8: #{decode_xyz_pos_embed.1} parent=0 // pred_region
    _
  $region9: #{decode_xyz_pos_embed.1} parent=0 // pred_fallthru
    _
  // Predicated region
  $region10: #{decode_xyz_pos_embed.1} parent=0 // pred_check
    _
  $region11: #{decode_xyz_pos_embed.1} parent=0 // pred_check_branch
    %13 = sbr.rel (0) target = $region13
  $region12: #{decode_xyz_pos_embed.1} parent=0 // pred_region
    _
  $region13: #{decode_xyz_pos_embed.1} parent=0 // pred_fallthru
    _
  %v14 = vld [vmem:[%s0] sm:$0xf]
  %v15 = vld [vmem:[%s1] sm:$0xff]
  %v16 = vld [vmem:[%s1 + $0x8] sm:$0xf]
  %v17 = vld [vmem:[%s2] sm:$0x1]
  %v19 = vlaneseq
  %v20 = vshrl.u32 %v19, 7
  %v21 = vsub.s32 0, %v20
  %v22 = vrot.slane %v17, %v21
  %vm24 = vcmask 97280
  %v26 = vsel %vm24, %v14, 0
  %vm28 = vcmask 1043456
  %v30 = vsel %vm28, %v16, 0
  %32 = vmatprep.subr.mxu0 0.0
  %v33 = vand.u32 %v15, 4294901760
  %34 = vmatpush1.msra.mxu0 %v33
  %35 = vmatprep.subr.mxu0 0.0
  %v36 = vand.u32 %v30, 4294901760
  %37 = vmatpush1.msra.mxu0 %v36
  %38 = vmatprep.subr.mxu0 0.0
  %39 = vmatpush1.msra.mxu0 0.0
  %40 = vmatprep.subr.mxu0 0.0
  %41 = vmatpush1.msra.mxu0 0.0
  %42 = vmatprep.subr.mxu0 0.0
  %43 = vmatpush1.msra.mxu0 0.0
  %44 = vmatprep.subr.mxu0 0.0
  %45 = vmatpush1.msra.mxu0 0.0
  %46 = vmatprep.subr.mxu0 0.0
  %47 = vmatpush1.msra.mxu0 0.0
  %48 = vmatprep.subr.mxu0 0.0
  %49 = vmatpush1.msra.mxu0 0.0
  %50 = vmatprep.subr.mxu0 0.0
  %51 = vmatpush1.msra.mxu0 0.0
  %52 = vmatprep.subr.mxu0 0.0
  %53 = vmatpush1.msra.mxu0 0.0
  %54 = vmatprep.subr.mxu0 0.0
  %55 = vmatpush1.msra.mxu0 0.0
  %56 = vmatprep.subr.mxu0 0.0
  %57 = vmatpush1.msra.mxu0 0.0
  %58 = vmatprep.subr.mxu0 0.0
  %59 = vmatpush1.msra.mxu0 0.0
  %60 = vmatprep.subr.mxu0 0.0
  %61 = vmatpush1.msra.mxu0 0.0
  %62 = vmatprep.subr.mxu0 0.0
  %63 = vmatpush1.msra.mxu0 0.0
  %64 = vmatprep.subr.mxu0 0.0
  %65 = vmatpush1.msra.mxu0 0.0
  %66 = vmatprep.subr.mxu0 0.0
  %67 = vmatpush1.msra.mxu0 0.0
  %68 = vmatprep.subr.mxu0 0.0
  %69 = vmatpush1.msra.mxu0 0.0
  %70 = vmatprep.subr.mxu0 0.0
  %71 = vmatpush1.msra.mxu0 0.0
  %72 = vmatprep.subr.mxu0 0.0
  %73 = vmatpush1.msra.mxu0 0.0
  %74 = vmatprep.subr.mxu0 0.0
  %75 = vmatpush1.msra.mxu0 0.0
  %76 = vmatprep.subr.mxu0 0.0
  %77 = vmatpush1.msra.mxu0 0.0
  %78 = vmatprep.subr.mxu0 0.0
  %79 = vmatpush1.msra.mxu0 0.0
  %80 = vmatprep.subr.mxu0 0.0
  %81 = vmatpush1.msra.mxu0 0.0
  %82 = vmatprep.subr.mxu0 0.0
  %83 = vmatpush1.msra.mxu0 0.0
  %84 = vmatprep.subr.mxu0 0.0
  %85 = vmatpush1.msra.mxu0 0.0
  %86 = vmatprep.subr.mxu0 0.0
  %87 = vmatpush1.msra.mxu0 0.0
  %88 = vmatprep.subr.mxu0 0.0
  %89 = vmatpush1.msra.mxu0 0.0
  %90 = vmatprep.subr.mxu0 0.0
  %91 = vmatpush1.msra.mxu0 0.0
  %92 = vmatprep.subr.mxu0 0.0
  %93 = vmatpush1.msra.mxu0 0.0
  %94 = vmatprep.subr.mxu0 0.0
  %95 = vmatpush1.msra.mxu0 0.0
  %96 = vmatprep.subr.mxu0 0.0
  %97 = vmatpush1.msra.mxu0 0.0
  %98 = vmatprep.mubr.f32.mxu0 0.0
  %v99 = vand.u32 %v26, 4294901760
  %v100 = vsub.f32 %v26, %v99
  %v101 = vand.u32 %v100, 4294901760
  %v102 = vsub.f32 %v100, %v101
  %v103 = vand.u32 %v102, 4294901760
  %104 = vmatmul.mubr.f32.gmra.mrb[0].mxu0 %v103
  %v105 = vpop.f32.mrb[0].mxu0
  %v106 = vadd.f32 %v22, %v105
  %v107 = vpop.f32.mrb[0].mxu0
  %108 = vdwg.mxu0
  %109 = vmatprep.subr.mxu0 0.0
  %v110 = vand.u32 %v15, 4294901760
  %v111 = vsub.f32 %v15, %v110
  %v112 = vand.u32 %v111, 4294901760
  %v113 = vsub.f32 %v111, %v112
  %v114 = vand.u32 %v113, 4294901760
  %115 = vmatpush1.msra.mxu0 %v114
  %116 = vmatprep.subr.mxu0 0.0
  %v117 = vand.u32 %v30, 4294901760
  %v118 = vsub.f32 %v30, %v117
  %v119 = vand.u32 %v118, 4294901760
  %v120 = vsub.f32 %v118, %v119
  %v121 = vand.u32 %v120, 4294901760
  %122 = vmatpush1.msra.mxu0 %v121
  %123 = vmatprep.subr.mxu0 0.0
  %124 = vmatpush1.msra.mxu0 0.0
  %125 = vmatprep.subr.mxu0 0.0
  %126 = vmatpush1.msra.mxu0 0.0
  %127 = vmatprep.subr.mxu0 0.0
  %128 = vmatpush1.msra.mxu0 0.0
  %129 = vmatprep.subr.mxu0 0.0
  %130 = vmatpush1.msra.mxu0 0.0
  %131 = vmatprep.subr.mxu0 0.0
  %132 = vmatpush1.msra.mxu0 0.0
  %133 = vmatprep.subr.mxu0 0.0
  %134 = vmatpush1.msra.mxu0 0.0
  %135 = vmatprep.subr.mxu0 0.0
  %136 = vmatpush1.msra.mxu0 0.0
  %137 = vmatprep.subr.mxu0 0.0
  %138 = vmatpush1.msra.mxu0 0.0
  %139 = vmatprep.subr.mxu0 0.0
  %140 = vmatpush1.msra.mxu0 0.0
  %141 = vmatprep.subr.mxu0 0.0
  %142 = vmatpush1.msra.mxu0 0.0
  %143 = vmatprep.subr.mxu0 0.0
  %144 = vmatpush1.msra.mxu0 0.0
  %145 = vmatprep.subr.mxu0 0.0
  %146 = vmatpush1.msra.mxu0 0.0
  %147 = vmatprep.subr.mxu0 0.0
  %148 = vmatpush1.msra.mxu0 0.0
  %149 = vmatprep.subr.mxu0 0.0
  %150 = vmatpush1.msra.mxu0 0.0
  %151 = vmatprep.subr.mxu0 0.0
  %152 = vmatpush1.msra.mxu0 0.0
  %153 = vmatprep.subr.mxu0 0.0
  %154 = vmatpush1.msra.mxu0 0.0
  %155 = vmatprep.subr.mxu0 0.0
  %156 = vmatpush1.msra.mxu0 0.0
  %157 = vmatprep.subr.mxu0 0.0
  %158 = vmatpush1.msra.mxu0 0.0
  %159 = vmatprep.subr.mxu0 0.0
  %160 = vmatpush1.msra.mxu0 0.0
  %161 = vmatprep.subr.mxu0 0.0
  %162 = vmatpush1.msra.mxu0 0.0
  %163 = vmatprep.subr.mxu0 0.0
  %164 = vmatpush1.msra.mxu0 0.0
  %165 = vmatprep.subr.mxu0 0.0
  %166 = vmatpush1.msra.mxu0 0.0
  %167 = vmatprep.subr.mxu0 0.0
  %168 = vmatpush1.msra.mxu0 0.0
  %169 = vmatprep.subr.mxu0 0.0
  %170 = vmatpush1.msra.mxu0 0.0
  %171 = vmatprep.subr.mxu0 0.0
  %172 = vmatpush1.msra.mxu0 0.0
  %173 = vmatprep.subr.mxu0 0.0
  %174 = vmatpush1.msra.mxu0 0.0
  %175 = vmatprep.subr.mxu0 0.0
  %176 = vmatpush1.msra.mxu0 0.0
  %177 = vmatprep.subr.mxu0 0.0
  %178 = vmatpush1.msra.mxu0 0.0
  %179 = vmatprep.subr.mxu0 0.0
  %180 = vmatpush1.msra.mxu0 0.0
  %181 = vmatprep.subr.mxu0 0.0
  %182 = vmatpush1.msra.mxu0 0.0
  %183 = vmatprep.mubr.f32.mxu0 0.0
  %v184 = vand.u32 %v26, 4294901760
  %185 = vmatmul.mubr.f32.gmra.mrb[0].mxu0 %v184
  %v186 = vpop.f32.mrb[0].mxu0
  %v187 = vadd.f32 %v106, %v186
  %v188 = vpop.f32.mrb[0].mxu0
  %189 = vdwg.mxu0
  %190 = vmatprep.subr.mxu0 0.0
  %v191 = vand.u32 %v15, 4294901760
  %v192 = vsub.f32 %v15, %v191
  %193 = vmatpush1.msra.mxu0 %v192
  %194 = vmatprep.subr.mxu0 0.0
  %v195 = vand.u32 %v30, 4294901760
  %v196 = vsub.f32 %v30, %v195
  %197 = vmatpush1.msra.mxu0 %v196
  %198 = vmatprep.subr.mxu0 0.0
  %199 = vmatpush1.msra.mxu0 0.0
  %200 = vmatprep.subr.mxu0 0.0
  %201 = vmatpush1.msra.mxu0 0.0
  %202 = vmatprep.subr.mxu0 0.0
  %203 = vmatpush1.msra.mxu0 0.0
  %204 = vmatprep.subr.mxu0 0.0
  %205 = vmatpush1.msra.mxu0 0.0
  %206 = vmatprep.subr.mxu0 0.0
  %207 = vmatpush1.msra.mxu0 0.0
  %208 = vmatprep.subr.mxu0 0.0
  %209 = vmatpush1.msra.mxu0 0.0
  %210 = vmatprep.subr.mxu0 0.0
  %211 = vmatpush1.msra.mxu0 0.0
  %212 = vmatprep.subr.mxu0 0.0
  %213 = vmatpush1.msra.mxu0 0.0
  %214 = vmatprep.subr.mxu0 0.0
  %215 = vmatpush1.msra.mxu0 0.0
  %216 = vmatprep.subr.mxu0 0.0
  %217 = vmatpush1.msra.mxu0 0.0
  %218 = vmatprep.subr.mxu0 0.0
  %219 = vmatpush1.msra.mxu0 0.0
  %220 = vmatprep.subr.mxu0 0.0
  %221 = vmatpush1.msra.mxu0 0.0
  %222 = vmatprep.subr.mxu0 0.0
  %223 = vmatpush1.msra.mxu0 0.0
  %224 = vmatprep.subr.mxu0 0.0
  %225 = vmatpush1.msra.mxu0 0.0
  %226 = vmatprep.subr.mxu0 0.0
  %227 = vmatpush1.msra.mxu0 0.0
  %228 = vmatprep.subr.mxu0 0.0
  %229 = vmatpush1.msra.mxu0 0.0
  %230 = vmatprep.subr.mxu0 0.0
  %231 = vmatpush1.msra.mxu0 0.0
  %232 = vmatprep.subr.mxu0 0.0
  %233 = vmatpush1.msra.mxu0 0.0
  %234 = vmatprep.subr.mxu0 0.0
  %235 = vmatpush1.msra.mxu0 0.0
  %236 = vmatprep.subr.mxu0 0.0
  %237 = vmatpush1.msra.mxu0 0.0
  %238 = vmatprep.subr.mxu0 0.0
  %239 = vmatpush1.msra.mxu0 0.0
  %240 = vmatprep.subr.mxu0 0.0
  %241 = vmatpush1.msra.mxu0 0.0
  %242 = vmatprep.subr.mxu0 0.0
  %243 = vmatpush1.msra.mxu0 0.0
  %244 = vmatprep.subr.mxu0 0.0
  %245 = vmatpush1.msra.mxu0 0.0
  %246 = vmatprep.subr.mxu0 0.0
  %247 = vmatpush1.msra.mxu0 0.0
  %248 = vmatprep.subr.mxu0 0.0
  %249 = vmatpush1.msra.mxu0 0.0
  %250 = vmatprep.subr.mxu0 0.0
  %251 = vmatpush1.msra.mxu0 0.0
  %252 = vmatprep.subr.mxu0 0.0
  %253 = vmatpush1.msra.mxu0 0.0
  %254 = vmatprep.subr.mxu0 0.0
  %255 = vmatpush1.msra.mxu0 0.0
  %256 = vmatprep.subr.mxu0 0.0
  %257 = vmatpush1.msra.mxu0 0.0
  %258 = vmatprep.mubr.f32.mxu0 0.0
  %v259 = vand.u32 %v26, 4294901760
  %v260 = vsub.f32 %v26, %v259
  %261 = vmatmul.mubr.f32.gmra.mrb[0].mxu0 %v260
  %v262 = vpop.f32.mrb[0].mxu0
  %v263 = vadd.f32 %v187, %v262
  %v264 = vpop.f32.mrb[0].mxu0
  %265 = vdwg.mxu0
  %266 = vmatprep.subr.mxu0 0.0
  %v267 = vand.u32 %v15, 4294901760
  %268 = vmatpush1.msra.mxu0 %v267
  %269 = vmatprep.subr.mxu0 0.0
  %v270 = vand.u32 %v30, 4294901760
  %271 = vmatpush1.msra.mxu0 %v270
  %272 = vmatprep.subr.mxu0 0.0
  %273 = vmatpush1.msra.mxu0 0.0
  %274 = vmatprep.subr.mxu0 0.0
  %275 = vmatpush1.msra.mxu0 0.0
  %276 = vmatprep.subr.mxu0 0.0
  %277 = vmatpush1.msra.mxu0 0.0
  %278 = vmatprep.subr.mxu0 0.0
  %279 = vmatpush1.msra.mxu0 0.0
  %280 = vmatprep.subr.mxu0 0.0
  %281 = vmatpush1.msra.mxu0 0.0
  %282 = vmatprep.subr.mxu0 0.0
  %283 = vmatpush1.msra.mxu0 0.0
  %284 = vmatprep.subr.mxu0 0.0
  %285 = vmatpush1.msra.mxu0 0.0
  %286 = vmatprep.subr.mxu0 0.0
  %287 = vmatpush1.msra.mxu0 0.0
  %288 = vmatprep.subr.mxu0 0.0
  %289 = vmatpush1.msra.mxu0 0.0
  %290 = vmatprep.subr.mxu0 0.0
  %291 = vmatpush1.msra.mxu0 0.0
  %292 = vmatprep.subr.mxu0 0.0
  %293 = vmatpush1.msra.mxu0 0.0
  %294 = vmatprep.subr.mxu0 0.0
  %295 = vmatpush1.msra.mxu0 0.0
  %296 = vmatprep.subr.mxu0 0.0
  %297 = vmatpush1.msra.mxu0 0.0
  %298 = vmatprep.subr.mxu0 0.0
  %299 = vmatpush1.msra.mxu0 0.0
  %300 = vmatprep.subr.mxu0 0.0
  %301 = vmatpush1.msra.mxu0 0.0
  %302 = vmatprep.subr.mxu0 0.0
  %303 = vmatpush1.msra.mxu0 0.0
  %304 = vmatprep.subr.mxu0 0.0
  %305 = vmatpush1.msra.mxu0 0.0
  %306 = vmatprep.subr.mxu0 0.0
  %307 = vmatpush1.msra.mxu0 0.0
  %308 = vmatprep.subr.mxu0 0.0
  %309 = vmatpush1.msra.mxu0 0.0
  %310 = vmatprep.subr.mxu0 0.0
  %311 = vmatpush1.msra.mxu0 0.0
  %312 = vmatprep.subr.mxu0 0.0
  %313 = vmatpush1.msra.mxu0 0.0
  %314 = vmatprep.subr.mxu0 0.0
  %315 = vmatpush1.msra.mxu0 0.0
  %316 = vmatprep.subr.mxu0 0.0
  %317 = vmatpush1.msra.mxu0 0.0
  %318 = vmatprep.subr.mxu0 0.0
  %319 = vmatpush1.msra.mxu0 0.0
  %320 = vmatprep.subr.mxu0 0.0
  %321 = vmatpush1.msra.mxu0 0.0
  %322 = vmatprep.subr.mxu0 0.0
  %323 = vmatpush1.msra.mxu0 0.0
  %324 = vmatprep.subr.mxu0 0.0
  %325 = vmatpush1.msra.mxu0 0.0
  %326 = vmatprep.subr.mxu0 0.0
  %327 = vmatpush1.msra.mxu0 0.0
  %328 = vmatprep.subr.mxu0 0.0
  %329 = vmatpush1.msra.mxu0 0.0
  %330 = vmatprep.subr.mxu0 0.0
  %331 = vmatpush1.msra.mxu0 0.0
  %332 = vmatprep.mubr.f32.mxu0 0.0
  %v333 = vand.u32 %v26, 4294901760
  %v334 = vsub.f32 %v26, %v333
  %v335 = vand.u32 %v334, 4294901760
  %336 = vmatmul.mubr.f32.gmra.mrb[0].mxu0 %v335
  %v337 = vpop.f32.mrb[0].mxu0
  %v338 = vadd.f32 %v263, %v337
  %v339 = vpop.f32.mrb[0].mxu0
  %340 = vdwg.mxu0
  %341 = vmatprep.subr.mxu0 0.0
  %v342 = vand.u32 %v15, 4294901760
  %v343 = vsub.f32 %v15, %v342
  %v344 = vand.u32 %v343, 4294901760
  %345 = vmatpush1.msra.mxu0 %v344
  %346 = vmatprep.subr.mxu0 0.0
  %v347 = vand.u32 %v30, 4294901760
  %v348 = vsub.f32 %v30, %v347
  %v349 = vand.u32 %v348, 4294901760
  %350 = vmatpush1.msra.mxu0 %v349
  %351 = vmatprep.subr.mxu0 0.0
  %352 = vmatpush1.msra.mxu0 0.0
  %353 = vmatprep.subr.mxu0 0.0
  %354 = vmatpush1.msra.mxu0 0.0
  %355 = vmatprep.subr.mxu0 0.0
  %356 = vmatpush1.msra.mxu0 0.0
  %357 = vmatprep.subr.mxu0 0.0
  %358 = vmatpush1.msra.mxu0 0.0
  %359 = vmatprep.subr.mxu0 0.0
  %360 = vmatpush1.msra.mxu0 0.0
  %361 = vmatprep.subr.mxu0 0.0
  %362 = vmatpush1.msra.mxu0 0.0
  %363 = vmatprep.subr.mxu0 0.0
  %364 = vmatpush1.msra.mxu0 0.0
  %365 = vmatprep.subr.mxu0 0.0
  %366 = vmatpush1.msra.mxu0 0.0
  %367 = vmatprep.subr.mxu0 0.0
  %368 = vmatpush1.msra.mxu0 0.0
  %369 = vmatprep.subr.mxu0 0.0
  %370 = vmatpush1.msra.mxu0 0.0
  %371 = vmatprep.subr.mxu0 0.0
  %372 = vmatpush1.msra.mxu0 0.0
  %373 = vmatprep.subr.mxu0 0.0
  %374 = vmatpush1.msra.mxu0 0.0
  %375 = vmatprep.subr.mxu0 0.0
  %376 = vmatpush1.msra.mxu0 0.0
  %377 = vmatprep.subr.mxu0 0.0
  %378 = vmatpush1.msra.mxu0 0.0
  %379 = vmatprep.subr.mxu0 0.0
  %380 = vmatpush1.msra.mxu0 0.0
  %381 = vmatprep.subr.mxu0 0.0
  %382 = vmatpush1.msra.mxu0 0.0
  %383 = vmatprep.subr.mxu0 0.0
  %384 = vmatpush1.msra.mxu0 0.0
  %385 = vmatprep.subr.mxu0 0.0
  %386 = vmatpush1.msra.mxu0 0.0
  %387 = vmatprep.subr.mxu0 0.0
  %388 = vmatpush1.msra.mxu0 0.0
  %389 = vmatprep.subr.mxu0 0.0
  %390 = vmatpush1.msra.mxu0 0.0
  %391 = vmatprep.subr.mxu0 0.0
  %392 = vmatpush1.msra.mxu0 0.0
  %393 = vmatprep.subr.mxu0 0.0
  %394 = vmatpush1.msra.mxu0 0.0
  %395 = vmatprep.subr.mxu0 0.0
  %396 = vmatpush1.msra.mxu0 0.0
  %397 = vmatprep.subr.mxu0 0.0
  %398 = vmatpush1.msra.mxu0 0.0
  %399 = vmatprep.subr.mxu0 0.0
  %400 = vmatpush1.msra.mxu0 0.0
  %401 = vmatprep.subr.mxu0 0.0
  %402 = vmatpush1.msra.mxu0 0.0
  %403 = vmatprep.subr.mxu0 0.0
  %404 = vmatpush1.msra.mxu0 0.0
  %405 = vmatprep.subr.mxu0 0.0
  %406 = vmatpush1.msra.mxu0 0.0
  %407 = vmatprep.subr.mxu0 0.0
  %408 = vmatpush1.msra.mxu0 0.0
  %409 = vmatprep.subr.mxu0 0.0
  %410 = vmatpush1.msra.mxu0 0.0
  %411 = vmatprep.mubr.f32.mxu0 0.0
  %v412 = vand.u32 %v26, 4294901760
  %413 = vmatmul.mubr.f32.gmra.mrb[0].mxu0 %v412
  %v414 = vpop.f32.mrb[0].mxu0
  %v415 = vadd.f32 %v338, %v414
  %v416 = vpop.f32.mrb[0].mxu0
  %417 = vdwg.mxu0
  %418 = vmatprep.subr.mxu0 0.0
  %v419 = vand.u32 %v15, 4294901760
  %420 = vmatpush1.msra.mxu0 %v419
  %421 = vmatprep.subr.mxu0 0.0
  %v422 = vand.u32 %v30, 4294901760
  %423 = vmatpush1.msra.mxu0 %v422
  %424 = vmatprep.subr.mxu0 0.0
  %425 = vmatpush1.msra.mxu0 0.0
  %426 = vmatprep.subr.mxu0 0.0
  %427 = vmatpush1.msra.mxu0 0.0
  %428 = vmatprep.subr.mxu0 0.0
  %429 = vmatpush1.msra.mxu0 0.0
  %430 = vmatprep.subr.mxu0 0.0
  %431 = vmatpush1.msra.mxu0 0.0
  %432 = vmatprep.subr.mxu0 0.0
  %433 = vmatpush1.msra.mxu0 0.0
  %434 = vmatprep.subr.mxu0 0.0
  %435 = vmatpush1.msra.mxu0 0.0
  %436 = vmatprep.subr.mxu0 0.0
  %437 = vmatpush1.msra.mxu0 0.0
  %438 = vmatprep.subr.mxu0 0.0
  %439 = vmatpush1.msra.mxu0 0.0
  %440 = vmatprep.subr.mxu0 0.0
  %441 = vmatpush1.msra.mxu0 0.0
  %442 = vmatprep.subr.mxu0 0.0
  %443 = vmatpush1.msra.mxu0 0.0
  %444 = vmatprep.subr.mxu0 0.0
  %445 = vmatpush1.msra.mxu0 0.0
  %446 = vmatprep.subr.mxu0 0.0
  %447 = vmatpush1.msra.mxu0 0.0
  %448 = vmatprep.subr.mxu0 0.0
  %449 = vmatpush1.msra.mxu0 0.0
  %450 = vmatprep.subr.mxu0 0.0
  %451 = vmatpush1.msra.mxu0 0.0
  %452 = vmatprep.subr.mxu0 0.0
  %453 = vmatpush1.msra.mxu0 0.0
  %454 = vmatprep.subr.mxu0 0.0
  %455 = vmatpush1.msra.mxu0 0.0
  %456 = vmatprep.subr.mxu0 0.0
  %457 = vmatpush1.msra.mxu0 0.0
  %458 = vmatprep.subr.mxu0 0.0
  %459 = vmatpush1.msra.mxu0 0.0
  %460 = vmatprep.subr.mxu0 0.0
  %461 = vmatpush1.msra.mxu0 0.0
  %462 = vmatprep.subr.mxu0 0.0
  %463 = vmatpush1.msra.mxu0 0.0
  %464 = vmatprep.subr.mxu0 0.0
  %465 = vmatpush1.msra.mxu0 0.0
  %466 = vmatprep.subr.mxu0 0.0
  %467 = vmatpush1.msra.mxu0 0.0
  %468 = vmatprep.subr.mxu0 0.0
  %469 = vmatpush1.msra.mxu0 0.0
  %470 = vmatprep.subr.mxu0 0.0
  %471 = vmatpush1.msra.mxu0 0.0
  %472 = vmatprep.subr.mxu0 0.0
  %473 = vmatpush1.msra.mxu0 0.0
  %474 = vmatprep.subr.mxu0 0.0
  %475 = vmatpush1.msra.mxu0 0.0
  %476 = vmatprep.subr.mxu0 0.0
  %477 = vmatpush1.msra.mxu0 0.0
  %478 = vmatprep.subr.mxu0 0.0
  %479 = vmatpush1.msra.mxu0 0.0
  %480 = vmatprep.subr.mxu0 0.0
  %481 = vmatpush1.msra.mxu0 0.0
  %482 = vmatprep.subr.mxu0 0.0
  %483 = vmatpush1.msra.mxu0 0.0
  %484 = vmatprep.mubr.f32.mxu0 0.0
  %v485 = vand.u32 %v26, 4294901760
  %486 = vmatmul.mubr.f32.gmra.mrb[0].mxu0 %v485
  %v487 = vpop.f32.mrb[0].mxu0
  %v488 = vadd.f32 %v415, %v487
  %v489 = vpop.f32.mrb[0].mxu0
  %490 = vdwg.mxu0
  %491 = vst [vmem:[%s3] sm:$0xf] %v488
  // Predicated region
  $region14: #{decode_xyz_pos_embed.1} parent=0 // pred_check
    _
  $region15: #{decode_xyz_pos_embed.1} parent=0 // pred_check_branch
    %493 = sbr.rel (0) target = $region17
  $region16: #{decode_xyz_pos_embed.1} parent=0 // pred_region
    _
  $region17: #{decode_xyz_pos_embed.1} parent=0 // pred_fallthru
    _
  // Predicated region
  $region18: #{decode_xyz_pos_embed.1} parent=0 // pred_check
    _
  $region19: #{decode_xyz_pos_embed.1} parent=0 // pred_check_branch
    %495 = sbr.rel (0) target = $region21
  $region20: #{decode_xyz_pos_embed.1} parent=0 // pred_region
    _
  $region21: #{decode_xyz_pos_embed.1} parent=0 // pred_fallthru
    _

</llo_original>
